<compile_context>
chip_gen: v7x
topology: tpu7x:2x2x1
jax: 0.10.0
libtpu: 0.0.40
codegen_flags: <defaults>
</compile_context>

<pallas_src>
import jax
import jax.numpy as jnp
from jax.experimental import pallas as pl
from jax.experimental.pallas import tpu as pltpu

_LANES = 128
_SUBLANES = 8
_TARGET_BLOCK_BYTES = 2 << 20        # ~2 MiB per block buffer


def _neg_scale_kernel(alpha_ref, g_ref, o_ref):
    # alpha_ref: SMEM f32 (1,). Backward: dx = -alpha * grads (f32 scale, cast product).
    neg_alpha = -alpha_ref[0]
    o_ref[...] = (g_ref[...].astype(jnp.float32) * neg_alpha).astype(o_ref.dtype)


def _plan(rows, cols, itemsize):
    """Pick (block_rows, block_cols) for a lane-dense [rows, cols] slab."""
    pack = max(1, 4 // itemsize)            # sublane packing (f32=1, bf16=2, i8=4)
    row_align = _SUBLANES * pack            # rows per fully-packed vreg
    budget = max(1, _TARGET_BLOCK_BYTES // itemsize)   # elements per block buffer

    if cols * row_align > budget:
        # Very wide native lane width: block the lane axis too (rare). Budget is
        # computed against the sublane-padded VMEM footprint (row_align rows).
        block_rows = min(rows, row_align)
        block_cols = max(_LANES, (budget // row_align) // _LANES * _LANES)
        block_cols = min(block_cols, cols)
    else:
        block_cols = cols
        block_rows = max(row_align, (budget // cols) // row_align * row_align)
        block_rows = min(rows, block_rows)

    # v7x has 2 TensorCores: give the grid >=2 blocks whenever the slab can be
    # split so dimension_semantics=("parallel",...) can shard it across cores.
    # Harmless on the single-core v5e/v6e.
    if pl.cdiv(rows, block_rows) * pl.cdiv(cols, block_cols) < 2:
        if rows > row_align:
            block_rows = max(row_align,
                             pl.cdiv(pl.cdiv(rows, 2), row_align) * row_align)
        elif cols > _LANES:
            block_cols = max(_LANES,
                             pl.cdiv(pl.cdiv(cols, 2), _LANES) * _LANES)
    return block_rows, block_cols


def _neg_scale(g, alpha):
    """Run the Pallas kernel computing -alpha * g, preserving g's shape/dtype."""
    orig_shape, orig_dtype = g.shape, g.dtype
    n = g.size
    if n == 0:
        return g
    itemsize = jnp.dtype(orig_dtype).itemsize

    if g.ndim >= 2 and orig_shape[-1] % _LANES == 0:
        # Fast path: native lane width. Collapsing only the leading dims keeps
        # the minor dim fixed -> free metadata reshape, no relayout copies.
        cols = orig_shape[-1]
        slab = g.reshape(-1, cols)
        pad = 0
    else:
        # Relayout is unavoidable: repack as a dense 128-lane slab and, only if
        # needed, pad the (<128-element) tail.
        cols = _LANES
        pad = (-n) % cols
        flat = g.reshape(-1)
        if pad:
            flat = jnp.pad(flat, (0, pad))
        slab = flat.reshape(-1, cols)

    rows = slab.shape[0]
    block_rows, block_cols = _plan(rows, cols, itemsize)
    grid = (pl.cdiv(rows, block_rows), pl.cdiv(cols, block_cols))

    alpha_arr = jnp.asarray(alpha, dtype=jnp.float32).reshape(1)

    out = pl.pallas_call(
        _neg_scale_kernel,
        out_shape=jax.ShapeDtypeStruct((rows, cols), orig_dtype),
        grid_spec=pltpu.PrefetchScalarGridSpec(
            num_scalar_prefetch=0,
            grid=grid,
            in_specs=[
                pl.BlockSpec(memory_space=pltpu.MemorySpace.SMEM),           # alpha
                pl.BlockSpec((block_rows, block_cols), lambda i, j: (i, j)),  # grads
            ],
            out_specs=pl.BlockSpec((block_rows, block_cols), lambda i, j: (i, j)),
        ),
        compiler_params=pltpu.CompilerParams(
            dimension_semantics=("parallel", "parallel"),
        ),
        # The upstream cotangent is dead after the backward: donate it.
        input_output_aliases={1: 0},
    )(alpha_arr, slab)

    if pad:
        return out.reshape(-1)[:n].reshape(orig_shape)
    return out.reshape(orig_shape)


@jax.custom_vjp
def _grl(x, alpha):
    # Identity forward (no copy needed: JAX arrays are immutable).
    return x


def _grl_fwd(x, alpha):
    return x, alpha


def _grl_bwd(alpha, g):
    return _neg_scale(g, alpha), jnp.zeros_like(alpha)


_grl.defvjp(_grl_fwd, _grl_bwd)


def gradient_reversal(x, alpha=1.0):
    """Forward = identity; backward = -alpha * grad (Pallas kernel)."""
    return _grl(x, jnp.asarray(alpha, dtype=jnp.float32))


class GradientReversal:
    """JAX/Pallas equivalent of the PyTorch GradientReversal module."""

    def __init__(self, alpha=1.0):
        self.alpha = alpha

    def __call__(self, x):
        return gradient_reversal(x, self.alpha)


if __name__ == "__main__":
    key = jax.random.PRNGKey(0)
    x = jax.random.normal(key, (2, 4, 16, 16), dtype=jnp.float32)  # NCHW

    grl = GradientReversal(alpha=1.0)

    # Forward: identity (no HBM traffic).
    y = jax.block_until_ready(grl(x))
    assert y.shape == x.shape and y.dtype == x.dtype
    assert jnp.allclose(y, x), "forward must be identity"

    # Backward: -alpha * upstream grad (dense 128-lane repack path, no pad).
    g = jax.block_until_ready(jax.grad(lambda v: jnp.sum(grl(v) * 2.0))(x))
    assert jnp.allclose(g, -2.0 * jnp.ones_like(x)), "backward must be -alpha*grad"

    # Fast path: trailing dim already a multiple of 128 -> native lane width,
    # multi-block grid, and a different alpha without a new kernel body.
    x_big = jax.random.normal(jax.random.PRNGKey(1), (8, 128, 1024),
                              dtype=jnp.float32)
    g_big = jax.block_until_ready(
        jax.grad(lambda v: jnp.sum(gradient_reversal(v, 0.5)))(x_big))
    assert jnp.allclose(g_big, -0.5 * jnp.ones_like(x_big))

    # bf16 path (sublane packing factor 2; f32 scale then cast).
    x_bf = jax.random.normal(jax.random.PRNGKey(2), (4, 256), dtype=jnp.bfloat16)
    g_bf = jax.block_until_ready(
        jax.grad(lambda v: jnp.sum(gradient_reversal(v, 2.0)))(x_bf))
    assert jnp.allclose(g_bf.astype(jnp.float32), -2.0)

    print("KERNEL_OK")
</pallas_src>

<mosaic_0001>
module attributes {stable_mosaic.version = 11 : i64} {
  func.func @_neg_scale_kernel(%arg0: i32, %arg1: i32, %arg2: memref<1xf32, #tpu.memory_space<smem>>, %arg3: memref<8x128xf32, #tpu.memory_space<vmem>>, %arg4: memref<8x128xf32, #tpu.memory_space<vmem>>) attributes {dimension_semantics = [#tpu.dimension_semantics<parallel>, #tpu.dimension_semantics<parallel>], iteration_bounds = array<i64: 2, 1>, scalar_prefetch = 0 : i64, scratch_operands = 0 : i64, tpu.core_type = #tpu.core_type<tc>, window_params = [{transform_indices = @transform_0, window_bounds = array<i64: 1>}, {transform_indices = @transform_1, window_bounds = array<i64: 8, 128>}, {transform_indices = @transform_2, window_bounds = array<i64: 8, 128>}]} {
    %c0 = arith.constant 0 : index
    %0 = memref.load %arg2[%c0] : memref<1xf32, #tpu.memory_space<smem>>
    %cst = arith.constant 0.000000e+00 : f32
    %1 = arith.subf %cst, %0 : f32
    %c0_0 = arith.constant 0 : index
    %c0_1 = arith.constant 0 : index
    %2 = vector.load %arg3[%c0_0, %c0_1] : memref<8x128xf32, #tpu.memory_space<vmem>>, vector<8x128xf32>
    %3 = vector.broadcast %1 : f32 to vector<8x128xf32>
    %4 = arith.mulf %2, %3 : vector<8x128xf32>
    %c0_2 = arith.constant 0 : index
    %c0_3 = arith.constant 0 : index
    %5 = vector.load %arg4[%c0_2, %c0_3] : memref<8x128xf32, #tpu.memory_space<vmem>>, vector<8x128xf32>
    tpu.vector_store %arg4[%c0_2, %c0_3], %4 {strides = array<i32>} : memref<8x128xf32, #tpu.memory_space<vmem>>, vector<8x128xf32>,
    return
  }
  func.func @transform_0(%arg0: i32, %arg1: i32) -> i32 {
    %c0_i32 = arith.constant 0 : i32
    %c0_i32_0 = arith.constant 0 : i32
    return %c0_i32 : i32
  }
  func.func @transform_1(%arg0: i32, %arg1: i32) -> (i32, i32) {
    %c0_i32 = arith.constant 0 : i32
    return %arg0, %arg1 : i32, i32
  }
  func.func @transform_2(%arg0: i32, %arg1: i32) -> (i32, i32) {
    %c0_i32 = arith.constant 0 : i32
    return %arg0, %arg1 : i32, i32
  }
}

</mosaic_0001>

<llo_original>
// kernel: tpu_custom_call.1
$region0: #{tpu_custom_call.1}
  #allocation0 [shape = 'u32[]', space=smem, size = 0x4, offset = 0x4, fixed_abs, tag = 'smem constant byte address 0x4 - core index']
  #allocation1 [shape = 'u32[144,128]{1,0:T(1,128)}', space=vmem, size = 0x12000, scoped, tag = 'internal scratch']
  #allocation2 [shape = 'f32[1]{0:T(128)S(6)}', space=smem, size = 0x200, scoped, tag = 'scoped memory for tpu_custom_call.1']
  %s0 = inlined_call_operand.<no memory space> [shape: f32[1], index: 0, kind: input, shape index: {}]
  %s1 = inlined_call_operand.hbm [shape: f32[16,128], index: 1, kind: input, shape index: {}, may-alias: {1,2}]
  %s2 = inlined_call_operand.hbm [shape: f32[16,128], index: 2, kind: output, shape index: {}, may-alias: {1,2}]
  %s3 = sld [smem:[#allocation0]]
  $region45: #{tpu_custom_call.1} parent=0
    _
  %s5 = ssub.s32 1, %s3
  %s6 = scalar_select 0, %s5, %s3
  %7 = sst [smem:[#allocation2]] %s0
  $region1: #{tpu_custom_call.1} parent=0
    #allocation3 [shape = 'u8[8192]{0}', space=vmem, size = 0x2000, scoped, tag = 'input window, operand 1']
    #allocation4 [shape = 's32[2]{0}', space=sflag, size = 0x8, scoped, tag = 'scoped memory for tpu_custom_call.1']
    #allocation5 [shape = 's32[2]{0}', space=sflag, size = 0x8, scoped, tag = 'scoped memory for tpu_custom_call.1']
    #allocation6 [shape = 'u8[8192]{0}', space=vmem, size = 0x2000, scoped, tag = 'output window, operand 0']
    %8 = vsyncpa [#allocation4], 0
    %s9 = scalar_lea.sflag [#allocation4], 1
    %10 = vsyncpa %s9, 0
    %11 = vsyncpa [#allocation5], 0
    %s12 = scalar_lea.sflag [#allocation5], 1
    %13 = vsyncpa %s12, 0
    loop: start=0, step=1, limit=4
    $region2: #{tpu_custom_call.1} parent=1 // loop_pre_header
      _
    $region3: #{tpu_custom_call.1} parent=1 // loop_header
      %s15 = sphi 0, %s19
      %p16 = scmp.ge.s32.totalorder %s15, 4
      %s22 = sphi 0, %s34
      %s23 = sphi 0, %s30
      %s24 = sphi 0, %s22
      %s25 = sphi 0, %s23
      %s26 = sphi 0, %s24
      %s27 = sphi 0, %s25
      %s35 = sphi 0, %s35
      %s37 = sphi 0, %s35
      %s38 = sphi 0, %s37
      %s52 = sphi 0, %s38
      %s60 = sphi 0, %s62
      %s63 = sphi 0, %s60
      %s64 = sphi 0, %s63
      %s80 = sphi 0, %s64
      %s88 = sphi 0, %s90
      %s91 = sphi 0, %s88
      %s92 = sphi 0, %s91
      %s108 = sphi 0, %s92
    $region4: #{tpu_custom_call.1} parent=1 // loop_header_branch
      %18 = sbr.rel (%p16) target = $region8
    $region5: #{tpu_custom_call.1} parent=1 // loop_body
      %s20 = ssub.s32 %s15, 1
      %s21 = ssub.s32 %s15, 2
      %s28 = sadd.s32 1, %s23
      %p29 = scmp.ge.s32.totalorder %s28, 1
      %s30 = scalar_select %p29, 0, %s28
      %s31 = sadd.s32 1, %s22
      %s32 = scalar_select %p29, %s31, %s22
      %p33 = scmp.ge.s32.totalorder %s32, 2
      %s34 = scalar_select %p33, 0, %s32
      %s36 = sadd.s32 %s35, 1
      %p39 = scmp.eq.s32.totalorder %s15, 1
      %p40 = scmp.ne.s32.totalorder %s35, %s37
      %p41 = scmp.eq.s32.totalorder %s15, 0
      %p42 = por %p40, %p41
      %p43 = scmp.ne.s32.totalorder %s35, %s37
      %p44 = scmp.eq.s32.totalorder %s20, 1
      %p45 = por %p43, %p44
      %p46 = scmp.ne.s32.totalorder %s37, %s38
      %p47 = scmp.eq.s32.totalorder %s20, 0
      %p48 = por %p46, %p47
      %p49 = scmp.ne.s32.totalorder %s37, %s38
      %p50 = scmp.eq.s32.totalorder %s21, 1
      %p51 = por %p49, %p50
      %p53 = scmp.ne.s32.totalorder %s38, %s52
      %p54 = scmp.eq.s32.totalorder %s21, 0
      %p55 = por %p53, %p54
      %s56 = ssub.s32 %s22, %s34
      %s57 = ssub.s32 %s23, %s30
      %s58 = sor.u32 %s56, %s57
      %p59 = scmp.eq.s32.totalorder %s58, 0
      %s61 = sadd.s32 %s60, 1
      %s62 = scalar_select %p59, %s60, %s61
      %p65 = pneg %p59
      %p66 = scmp.eq.s32.totalorder %s15, 1
      %p67 = por %p65, %p66
      %p68 = scmp.ne.s32.totalorder %s60, %s63
      %p69 = scmp.eq.s32.totalorder %s15, 0
      %p70 = por %p68, %p69
      %p71 = scmp.ne.s32.totalorder %s60, %s63
      %p72 = scmp.eq.s32.totalorder %s20, 1
      %p73 = por %p71, %p72
      %p74 = scmp.ne.s32.totalorder %s63, %s64
      %p75 = scmp.eq.s32.totalorder %s20, 0
      %p76 = por %p74, %p75
      %p77 = scmp.ne.s32.totalorder %s63, %s64
      %p78 = scmp.eq.s32.totalorder %s21, 1
      %p79 = por %p77, %p78
      %p81 = scmp.ne.s32.totalorder %s64, %s80
      %p82 = scmp.eq.s32.totalorder %s21, 0
      %p83 = por %p81, %p82
      %s84 = ssub.s32 %s22, %s34
      %s85 = ssub.s32 %s23, %s30
      %s86 = sor.u32 %s84, %s85
      %p87 = scmp.eq.s32.totalorder %s86, 0
      %s89 = sadd.s32 %s88, 1
      %s90 = scalar_select %p87, %s88, %s89
      %p93 = pneg %p87
      %p94 = scmp.eq.s32.totalorder %s15, 1
      %p95 = por %p93, %p94
      %p96 = scmp.ne.s32.totalorder %s88, %s91
      %p97 = scmp.eq.s32.totalorder %s15, 0
      %p98 = por %p96, %p97
      %p99 = scmp.ne.s32.totalorder %s88, %s91
      %p100 = scmp.eq.s32.totalorder %s20, 1
      %p101 = por %p99, %p100
      %p102 = scmp.ne.s32.totalorder %s91, %s92
      %p103 = scmp.eq.s32.totalorder %s20, 0
      %p104 = por %p102, %p103
      %p105 = scmp.ne.s32.totalorder %s91, %s92
      %p106 = scmp.eq.s32.totalorder %s21, 1
      %p107 = por %p105, %p106
      %p109 = scmp.ne.s32.totalorder %s92, %s108
      %p110 = scmp.eq.s32.totalorder %s21, 0
      %p111 = por %p109, %p110
      %p112 = scmp.le.s32.totalorder 1, %s15
      %p113 = scmp.lt.s32.totalorder %s15, 3
      %p114 = pnand %p112, %p113
      %p115 = pneg %p114
      // Predicated region
      $region9: #{tpu_custom_call.1} parent=5 // pred_check
        _
      $region10: #{tpu_custom_call.1} parent=5 // pred_check_branch
        %117 = sbr.rel (%p114) target = $region12
      $region11: #{tpu_custom_call.1} parent=5 // pred_region
        %s118 = ssub.s32 %s15, 1
        // Predicated region
        $region13: #{tpu_custom_call.1} parent=11 // pred_check
          %p119 = pneg %p48
        $region14: #{tpu_custom_call.1} parent=11 // pred_check_branch
          %121 = sbr.rel (%p119) target = $region16
        $region15: #{tpu_custom_call.1} parent=11 // pred_region
          _
        $region16: #{tpu_custom_call.1} parent=11 // pred_fallthru
          _
      $region12: #{tpu_custom_call.1} parent=5 // pred_fallthru
        _
      %p122 = scmp.lt.s32.totalorder %s15, 2
      // Predicated region
      $region17: #{tpu_custom_call.1} parent=5 // pred_check
        %p123 = pneg %p122
      $region18: #{tpu_custom_call.1} parent=5 // pred_check_branch
        %125 = sbr.rel (%p123) target = $region20
      $region19: #{tpu_custom_call.1} parent=5 // pred_region
        // Predicated region
        $region21: #{tpu_custom_call.1} parent=19 // pred_check
          %p126 = pneg %p70
        $region22: #{tpu_custom_call.1} parent=19 // pred_check_branch
          %128 = sbr.rel (%p126) target = $region24
        $region23: #{tpu_custom_call.1} parent=19 // pred_region
          %s129 = sand.u32 %s60, 1
          %s130 = scalar_lea.sflag [#allocation4], %s129
          %s131 = sand.u32 %s60, 1
          %s132 = smul.addr %s131, 8
          %s133 = scalar_lea.vmem [#allocation3], %s132
          %s135 = ssub.s32 128, 128
          %136 = vsyncadd %s130, %s135
          %s137 = sadd.s32 %s23, %s22
          %s138 = smul.addr %s137, 128
          %s139 = scalar_lea.hbm %s1, %s138
          %s141 = sshll.u32 %s133, 4
          %s142 = int_to_ptr.vmem [resolvable:$true] %s141
          %144 = dma.hbm_to_vmem [thread:$0]  %s139, 128, %s142, %s130
        $region24: #{tpu_custom_call.1} parent=19 // pred_fallthru
          _
      $region20: #{tpu_custom_call.1} parent=5 // pred_fallthru
        _
      %p145 = scmp.le.s32.totalorder 1, %s15
      %p146 = scmp.lt.s32.totalorder %s15, 3
      %p147 = pnand %p145, %p146
      %p148 = pneg %p147
      // Predicated region
      $region25: #{tpu_custom_call.1} parent=5 // pred_check
        _
      $region26: #{tpu_custom_call.1} parent=5 // pred_check_branch
        %150 = sbr.rel (%p147) target = $region28
      $region27: #{tpu_custom_call.1} parent=5 // pred_region
        %s151 = ssub.s32 %s15, 1
        %s152 = sand.u32 %s63, 1
        %s153 = scalar_lea.sflag [#allocation4], %s152
        %s154 = sand.u32 %s63, 1
        %s155 = smul.addr %s154, 8
        %s156 = scalar_lea.vmem [#allocation3], %s155
        // Predicated region
        $region29: #{tpu_custom_call.1} parent=27 // pred_check
          %p157 = pneg %p76
        $region30: #{tpu_custom_call.1} parent=27 // pred_check_branch
          %159 = sbr.rel (%p157) target = $region32
        $region31: #{tpu_custom_call.1} parent=27 // pred_region
          %160 = dma.done %s153, 128
        $region32: #{tpu_custom_call.1} parent=27 // pred_fallthru
          _
        %p161 = pneg %p48
        %p162 = pneg %p45
        %s163 = sand.u32 %s63, 1
        %s164 = scalar_lea.sflag [#allocation4], %s163
        %s165 = sand.u32 %s63, 1
        %s166 = smul.addr %s165, 8
        %s167 = scalar_lea.vmem [#allocation3], %s166
        %p168 = pneg %p76
        %p169 = pneg %p73
        %p170 = pneg %p104
        %p171 = pneg %p101
        %s172 = sand.u32 %s91, 1
        %s173 = scalar_lea.sflag [#allocation5], %s172
        %s174 = sand.u32 %s91, 1
        %s175 = smul.addr %s174, 8
        %s176 = scalar_lea.vmem [#allocation6], %s175
        %s177 = sld [smem:[#allocation2]]
        %s178 = ssub.f32 0.0, %s177
        %v179 = vld [vmem:[%s156] sm:$0xff]
        %v180 = vstv %s178
        %v181 = vmul.f32 %v179, %v180
        %182 = vst [vmem:[%s176] sm:$0xff] %v181
        %s183 = sand.u32 %s91, 1
        %s184 = scalar_lea.sflag [#allocation5], %s183
        %s185 = sand.u32 %s91, 1
        %s186 = smul.addr %s185, 8
        %s187 = scalar_lea.vmem [#allocation6], %s186
        // Predicated region
        $region33: #{tpu_custom_call.1} parent=27 // pred_check
          %p188 = pneg %p101
        $region34: #{tpu_custom_call.1} parent=27 // pred_check_branch
          %190 = sbr.rel (%p188) target = $region36
        $region35: #{tpu_custom_call.1} parent=27 // pred_region
          %s192 = ssub.s32 128, 128
          %193 = vsyncadd %s184, %s192
          %s194 = sadd.s32 %s25, %s24
          %s195 = smul.addr %s194, 128
          %s196 = scalar_lea.hbm %s2, %s195
          %s198 = sshll.u32 %s187, 4
          %s199 = int_to_ptr.vmem [resolvable:$true] %s198
          %201 = dma.vmem_to_hbm [thread:$0]  %s199, 128, %s196, %s184
        $region36: #{tpu_custom_call.1} parent=27 // pred_fallthru
          _
      $region28: #{tpu_custom_call.1} parent=5 // pred_fallthru
        _
      %p202 = scmp.le.s32.totalorder 2, %s15
      // Predicated region
      $region37: #{tpu_custom_call.1} parent=5 // pred_check
        %p203 = pneg %p202
      $region38: #{tpu_custom_call.1} parent=5 // pred_check_branch
        %205 = sbr.rel (%p203) target = $region40
      $region39: #{tpu_custom_call.1} parent=5 // pred_region
        %s206 = ssub.s32 %s15, 2
        // Predicated region
        $region41: #{tpu_custom_call.1} parent=39 // pred_check
          %p207 = pneg %p107
        $region42: #{tpu_custom_call.1} parent=39 // pred_check_branch
          %209 = sbr.rel (%p207) target = $region44
        $region43: #{tpu_custom_call.1} parent=39 // pred_region
          %s210 = sand.u32 %s92, 1
          %s211 = scalar_lea.sflag [#allocation5], %s210
          %s212 = sand.u32 %s92, 1
          %s213 = smul.addr %s212, 8
          %s214 = scalar_lea.vmem [#allocation6], %s213
          %215 = dma.done %s211, 128
        $region44: #{tpu_custom_call.1} parent=39 // pred_fallthru
          _
      $region40: #{tpu_custom_call.1} parent=5 // pred_fallthru
        _
    $region6: #{tpu_custom_call.1} parent=1 // loop_footer
      %s19 = sadd.s32 1, %s15
    $region7: #{tpu_custom_call.1} parent=1 // loop_footer_branch
      %14 = sbr.rel target = $region3
    $region8: #{tpu_custom_call.1} parent=1 // loop_exit
      _
    %216 = vsyncpa [#allocation4], 1
    %s217 = scalar_lea.sflag [#allocation4], 1
    %218 = vsyncpa %s217, 1
    %219 = vsyncpa [#allocation5], 1
    %s220 = scalar_lea.sflag [#allocation5], 1
    %221 = vsyncpa %s220, 1

</llo_original>
